<compile_context>
chip_gen: v6e
topology: v6e:2x2x1
jax: 0.10.0
libtpu: 0.0.40
codegen_flags: <defaults>
</compile_context>

<pallas_src>
import jax
import jax.numpy as jnp
from jax import lax
from jax.experimental import pallas as pl
from jax.experimental.pallas import tpu as pltpu


_LEAKY_SLOPE = 0.01  # PyTorch nn.LeakyReLU default negative_slope


def _leaky_relu(x):
    return jnp.where(x >= 0, x, _LEAKY_SLOPE * x)


# -----------------------------------------------------------------------------
# Pallas kernel: one whole BasicBlock, fused, all intermediates in vregs.
# -----------------------------------------------------------------------------
def _make_basic_block_kernel(K, pad2, T, Cmid, has_downsample, compute_dtype):
    """K: kernel size, pad2 = K//2 (conv2 padding), T: per-batch sequence length."""

    def kernel(px_ref, w1_ref, b1_ref, w2_ref, b2_ref, *rest):
        if has_downsample:
            (out_ref,) = rest
        else:
            xid_ref, out_ref = rest

        rows = px_ref.shape[0]          # rows per grid step = nb * T
        nb = rows // T

        # ---- conv1 (+ fused downsample conv) : ONE matmul on shared patches -
        # BN scale is pre-folded into the weights; b1 is the per-channel shift.
        px = px_ref[...]                                        # (rows, K*Cin)
        a = jnp.dot(px, w1_ref[...],
                    preferred_element_type=jnp.float32) + b1_ref[...]
        if has_downsample:
            a1 = a[:, :Cmid]            # conv1+bn1 pre-activation
            idn = a[:, Cmid:]           # downsample conv + bn (residual branch)
        else:
            a1 = a
            idn = xid_ref[...]          # identity residual (f32)

        y1 = _leaky_relu(a1)            # (rows, Cmid) f32

        # ---- conv2: im2col of the in-register intermediate -------------------
        # Zero halo of width pad2, then stack the K shifted views along the
        # channel axis -> a single MXU matmul of contraction depth K*Cmid.
        y1b = y1.reshape(nb, T, Cmid)
        if pad2 > 0:
            zpad = jnp.zeros((nb, pad2, Cmid), jnp.float32)
            ypad = jnp.concatenate([zpad, y1b, zpad], axis=1)   # (nb, T+2*pad2, Cmid)
        else:
            ypad = y1b
        p2 = jnp.concatenate([ypad[:, k:k + T, :] for k in range(K)], axis=-1)
        p2 = p2.reshape(rows, K * Cmid).astype(compute_dtype)

        a2 = jnp.dot(p2, w2_ref[...],
                     preferred_element_type=jnp.float32) + b2_ref[...]

        # ---- residual add + final activation (f32 epilogue) -----------------
        out_ref[...] = _leaky_relu(a2 + idn)

    return kernel


# -----------------------------------------------------------------------------
# Host-side helpers (parameter folding + im2col for the x branch).
# -----------------------------------------------------------------------------
def _fold_conv_bn(w_pt, bias, gamma, beta, mean, var, *, eps=1e-5,
                  compute_dtype=jnp.bfloat16):
    """Fold eval-mode BN into conv: (Cout,Cin,K) -> (K*Cin,Cout) weight + (1,Cout) shift."""
    scale = gamma / jnp.sqrt(var + eps)                           # (Cout,)
    w = jnp.transpose(w_pt, (2, 1, 0)) * scale[None, None, :]     # (K, Cin, Cout)
    Kk, Cin, Cout = w.shape
    w = w.reshape(Kk * Cin, Cout).astype(compute_dtype)
    shift = ((bias - mean) * scale + beta).reshape(1, Cout).astype(jnp.float32)
    return w, shift


def _im2col_nlc(x_nlc, K, pad):
    """x: (B, T, C) -> ((B, Tout, K*C), Tout); column order is (k-major, c-minor)."""
    B, T, C = x_nlc.shape
    Tout = T + 2 * pad - (K - 1)
    xp = jnp.pad(x_nlc, ((0, 0), (pad, pad), (0, 0)))
    cols = [xp[:, k:k + Tout, :] for k in range(K)]
    return jnp.concatenate(cols, axis=-1), Tout


def _pick_batch_block(B, T1):
    """Batches per grid step: sublane-aligned row count, >=256 rows when possible."""
    divisors = [d for d in range(1, B + 1) if B % d == 0]
    aligned = [d for d in divisors if (d * T1) % 8 == 0]
    if not aligned:
        return B                        # full-array block (always a legal block shape)
    for d in aligned:
        if d * T1 >= 256:               # enough rows to feed the MXU M dimension
            return d
    return aligned[-1]


def basic_block_apply(x, params, *, ker_size, first_dilation, stride=1,
                      dilation=1, has_downsample, compute_dtype=jnp.bfloat16):
    """x: (B, Cin, T) float32 (PyTorch NCL)  ->  (B, Cout, Tout) float32."""
    # TODO(synk): stride > 1 and dilation > 1 are not implemented (module defaults are 1).
    assert stride == 1 and dilation == 1
    assert ker_size % 2 == 1, "even kernel sizes change the conv2 output length"

    B, Cin, T = x.shape
    K, pad1, pad2 = ker_size, first_dilation, ker_size // 2
    Cmid = params["conv1_w"].shape[0]
    Cout = params["conv2_w"].shape[0]

    # Fold BN scale into the conv weights; bias+BN shift becomes one per-channel add.
    w1, b1 = _fold_conv_bn(params["conv1_w"], params["conv1_b"], params["bn1_g"],
                           params["bn1_b"], params["bn1_m"], params["bn1_v"],
                           compute_dtype=compute_dtype)
    w2, b2 = _fold_conv_bn(params["conv2_w"], params["conv2_b"], params["bn2_g"],
                           params["bn2_b"], params["bn2_m"], params["bn2_v"],
                           compute_dtype=compute_dtype)
    if has_downsample:
        wd, bd = _fold_conv_bn(params["convd_w"], params["convd_b"], params["bnd_g"],
                               params["bnd_b"], params["bnd_m"], params["bnd_v"],
                               compute_dtype=compute_dtype)
        # conv1 and downsample share the same patches -> fuse into one matmul.
        w1 = jnp.concatenate([w1, wd], axis=1)                   # (K*Cin, Cmid+Cout)
        b1 = jnp.concatenate([b1, bd], axis=1)                   # (1, Cmid+Cout)

    # Shared im2col patches for conv1 / downsample, channels-last, lane-dense 2D.
    x_nlc = jnp.transpose(x, (0, 2, 1))                          # (B, T, Cin)
    patches, T1 = _im2col_nlc(x_nlc, K, pad1)                    # (B, T1, K*Cin)
    patches = patches.reshape(B * T1, K * Cin).astype(compute_dtype)

    if not has_downsample:
        assert Cin == Cout and T1 == T, "identity residual needs matching shapes"

    nb = _pick_batch_block(B, T1)
    row_block = nb * T1
    grid = (B // nb,)

    inputs = [patches, w1, b1, w2, b2]
    in_specs = [
        pl.BlockSpec((row_block, K * Cin), lambda i: (i, 0)),
        pl.BlockSpec(w1.shape, lambda i: (0, 0)),
        pl.BlockSpec(b1.shape, lambda i: (0, 0)),
        pl.BlockSpec(w2.shape, lambda i: (0, 0)),
        pl.BlockSpec(b2.shape, lambda i: (0, 0)),
    ]
    if not has_downsample:
        x_id = x_nlc.reshape(B * T, Cin).astype(jnp.float32)
        inputs.append(x_id)
        in_specs.append(pl.BlockSpec((row_block, Cin), lambda i: (i, 0)))

    kernel = _make_basic_block_kernel(K, pad2, T1, Cmid, has_downsample, compute_dtype)

    out_flat = pl.pallas_call(
        kernel,
        out_shape=jax.ShapeDtypeStruct((B * T1, Cout), jnp.float32),
        grid=grid,
        in_specs=in_specs,
        out_specs=pl.BlockSpec((row_block, Cout), lambda i: (i, 0)),
        compiler_params=pltpu.CompilerParams(
            dimension_semantics=("parallel",)),
    )(*inputs)

    return jnp.transpose(out_flat.reshape(B, T1, Cout), (0, 2, 1))


# -----------------------------------------------------------------------------
# Pure-JAX reference (mirrors the PyTorch module, eval-mode BN), for validation.
# -----------------------------------------------------------------------------
def _conv1d_ncl(x, w, b, pad):
    out = lax.conv_general_dilated(
        x, w, window_strides=(1,), padding=[(pad, pad)],
        dimension_numbers=("NCH", "OIH", "NCH"),
        precision=lax.Precision.HIGHEST)
    return out + b[None, :, None]


def _bn_eval_ncl(x, gamma, beta, mean, var, eps=1e-5):
    inv = gamma / jnp.sqrt(var + eps)
    return (x - mean[None, :, None]) * inv[None, :, None] + beta[None, :, None]


def basic_block_reference(x, p, *, ker_size, first_dilation, has_downsample):
    out = _conv1d_ncl(x, p["conv1_w"], p["conv1_b"], first_dilation)
    out = _bn_eval_ncl(out, p["bn1_g"], p["bn1_b"], p["bn1_m"], p["bn1_v"])
    out = _leaky_relu(out)
    out = _conv1d_ncl(out, p["conv2_w"], p["conv2_b"], ker_size // 2)
    out = _bn_eval_ncl(out, p["bn2_g"], p["bn2_b"], p["bn2_m"], p["bn2_v"])
    if has_downsample:
        idn = _conv1d_ncl(x, p["convd_w"], p["convd_b"], first_dilation)
        idn = _bn_eval_ncl(idn, p["bnd_g"], p["bnd_b"], p["bnd_m"], p["bnd_v"])
    else:
        idn = x
    return _leaky_relu(out + idn)


# ----------------------------- parameter init --------------------------------
def init_basic_block_params(key, inplanes, planes, ker_size, has_downsample):
    def conv_bn(k, cin, cout):
        kw, kb, kg, kbe, km, kv = jax.random.split(k, 6)
        w = jax.random.normal(kw, (cout, cin, ker_size), jnp.float32) / jnp.sqrt(cin * ker_size)
        b = 0.05 * jax.random.normal(kb, (cout,), jnp.float32)
        g = 1.0 + 0.1 * jax.random.normal(kg, (cout,), jnp.float32)
        be = 0.1 * jax.random.normal(kbe, (cout,), jnp.float32)
        m = 0.1 * jax.random.normal(km, (cout,), jnp.float32)
        v = 1.0 + 0.1 * jnp.abs(jax.random.normal(kv, (cout,), jnp.float32))
        return w, b, g, be, m, v

    k1, k2, kd = jax.random.split(key, 3)
    p = {}
    (p["conv1_w"], p["conv1_b"], p["bn1_g"], p["bn1_b"],
     p["bn1_m"], p["bn1_v"]) = conv_bn(k1, inplanes, planes)
    (p["conv2_w"], p["conv2_b"], p["bn2_g"], p["bn2_b"],
     p["bn2_m"], p["bn2_v"]) = conv_bn(k2, planes, planes)
    if has_downsample:
        (p["convd_w"], p["convd_b"], p["bnd_g"], p["bnd_b"],
         p["bnd_m"], p["bnd_v"]) = conv_bn(kd, inplanes, planes)
    return p


# TODO(synk): BatchNorm1d is implemented in eval mode only (running statistics
# folded into per-channel scale/shift); training-mode batch statistics are not
# computed in-kernel.

if __name__ == "__main__":
    key = jax.random.PRNGKey(0)
    B, T = 2, 16
    # (inplanes, planes, ker_size, first_dilation, has_downsample)
    test_cfgs = [
        (4, 32, 7, 3, True),    # entry block with downsample branch
        (32, 32, 3, 1, False),  # identity-residual block
    ]
    for cfg_idx, (cin, cout, K, fd, ds) in enumerate(test_cfgs):
        key, kp, kx = jax.random.split(key, 3)
        params = init_basic_block_params(kp, cin, cout, K, ds)
        x = jax.random.normal(kx, (B, cin, T), jnp.float32)

        ref = basic_block_reference(x, params, ker_size=K, first_dilation=fd,
                                    has_downsample=ds)

        # f32 MXU path: tight semantic check of the fused kernel.
        out_f32 = basic_block_apply(x, params, ker_size=K, first_dilation=fd,
                                    has_downsample=ds, compute_dtype=jnp.float32)
        jax.block_until_ready(out_f32)
        assert out_f32.shape == ref.shape == (B, cout, T)
        assert out_f32.dtype == jnp.float32
        assert bool(jnp.allclose(out_f32, ref, rtol=5e-2, atol=5e-2)), \
            f"config {cfg_idx}: f32 kernel mismatch"

        # bf16-operand MXU path (default, fast): loose tolerance for bf16 rounding.
        out_bf16 = basic_block_apply(x, params, ker_size=K, first_dilation=fd,
                                     has_downsample=ds)
        jax.block_until_ready(out_bf16)
        assert out_bf16.shape == ref.shape and out_bf16.dtype == jnp.float32
        assert bool(jnp.allclose(out_bf16, ref, rtol=1e-1, atol=1e-1)), \
            f"config {cfg_idx}: bf16 kernel mismatch"

    print("KERNEL_OK")
</pallas_src>

<mosaic_0001>
module attributes {stable_mosaic.version = 11 : i64} {
  func.func @kernel(%arg0: i32, %arg1: memref<32x28xf32, #tpu.memory_space<vmem>>, %arg2: memref<28x64xf32, #tpu.memory_space<vmem>>, %arg3: memref<1x64xf32, #tpu.memory_space<vmem>>, %arg4: memref<224x32xf32, #tpu.memory_space<vmem>>, %arg5: memref<1x32xf32, #tpu.memory_space<vmem>>, %arg6: memref<32x32xf32, #tpu.memory_space<vmem>>) attributes {dimension_semantics = [#tpu.dimension_semantics<parallel>], iteration_bounds = array<i64: 1>, scalar_prefetch = 0 : i64, scratch_operands = 0 : i64, tpu.core_type = #tpu.core_type<tc>, window_params = [{transform_indices = @transform_0, window_bounds = array<i64: 32, 28>}, {pipeline_mode = #tpu.pipeline_mode<synchronous>, transform_indices = @transform_1, window_bounds = array<i64: 28, 64>}, {pipeline_mode = #tpu.pipeline_mode<synchronous>, transform_indices = @transform_2, window_bounds = array<i64: 1, 64>}, {pipeline_mode = #tpu.pipeline_mode<synchronous>, transform_indices = @transform_3, window_bounds = array<i64: 224, 32>}, {pipeline_mode = #tpu.pipeline_mode<synchronous>, transform_indices = @transform_4, window_bounds = array<i64: 1, 32>}, {transform_indices = @transform_5, window_bounds = array<i64: 32, 32>}]} {
    %c0 = arith.constant 0 : index
    %c0_0 = arith.constant 0 : index
    %0 = vector.load %arg1[%c0, %c0_0] : memref<32x28xf32, #tpu.memory_space<vmem>>, vector<32x28xf32>
    %c0_1 = arith.constant 0 : index
    %c0_2 = arith.constant 0 : index
    %1 = vector.load %arg2[%c0_1, %c0_2] : memref<28x64xf32, #tpu.memory_space<vmem>>, vector<28x64xf32>
    %cst = arith.constant dense<0.000000e+00> : vector<32x64xf32>
    %2 = tpu.matmul %0, %1, %cst {dimension_numbers = #tpu.dot_dimension_numbers<[1], [0], [0], [1], [0, 0, 1, 1], [], []>} : vector<32x28xf32>, vector<28x64xf32>, vector<32x64xf32> -> vector<32x64xf32>
    %c0_3 = arith.constant 0 : index
    %c0_4 = arith.constant 0 : index
    %3 = vector.load %arg3[%c0_3, %c0_4] : memref<1x64xf32, #tpu.memory_space<vmem>>, vector<1x64xf32>
    %4 = vector.broadcast %3 : vector<1x64xf32> to vector<32x64xf32>
    %5 = arith.addf %2, %4 : vector<32x64xf32>
    %6 = vector.extract_strided_slice %5 {offsets = [0, 0], sizes = [32, 32], strides = [1, 1]} : vector<32x64xf32> to vector<32x32xf32>
    %7 = vector.extract_strided_slice %5 {offsets = [0, 32], sizes = [32, 32], strides = [1, 1]} : vector<32x64xf32> to vector<32x32xf32>
    %cst_5 = arith.constant 0.000000e+00 : f32
    %8 = vector.broadcast %cst_5 : f32 to vector<32x32xf32>
    %9 = arith.cmpf oge, %6, %8 : vector<32x32xf32>
    %cst_6 = arith.constant 0.00999999977 : f32
    %10 = vector.broadcast %cst_6 : f32 to vector<32x32xf32>
    %11 = arith.mulf %10, %6 : vector<32x32xf32>
    %12 = arith.select %9, %6, %11 : vector<32x32xi1>, vector<32x32xf32>
    %13 = vector.shape_cast %12 : vector<32x32xf32> to vector<2x16x32xf32>
    %cst_7 = arith.constant 0.000000e+00 : f32
    %14 = vector.broadcast %cst_7 : f32 to vector<2x3x32xf32>
    %15 = tpu.concatenate %14, %13, %14 in 1 : vector<2x3x32xf32>, vector<2x16x32xf32>, vector<2x3x32xf32> -> vector<2x22x32xf32>
    %16 = vector.extract_strided_slice %15 {offsets = [0, 0, 0], sizes = [2, 16, 32], strides = [1, 1, 1]} : vector<2x22x32xf32> to vector<2x16x32xf32>
    %17 = vector.extract_strided_slice %15 {offsets = [0, 1, 0], sizes = [2, 16, 32], strides = [1, 1, 1]} : vector<2x22x32xf32> to vector<2x16x32xf32>
    %18 = vector.extract_strided_slice %15 {offsets = [0, 2, 0], sizes = [2, 16, 32], strides = [1, 1, 1]} : vector<2x22x32xf32> to vector<2x16x32xf32>
    %19 = vector.extract_strided_slice %15 {offsets = [0, 3, 0], sizes = [2, 16, 32], strides = [1, 1, 1]} : vector<2x22x32xf32> to vector<2x16x32xf32>
    %20 = vector.extract_strided_slice %15 {offsets = [0, 4, 0], sizes = [2, 16, 32], strides = [1, 1, 1]} : vector<2x22x32xf32> to vector<2x16x32xf32>
    %21 = vector.extract_strided_slice %15 {offsets = [0, 5, 0], sizes = [2, 16, 32], strides = [1, 1, 1]} : vector<2x22x32xf32> to vector<2x16x32xf32>
    %22 = vector.extract_strided_slice %15 {offsets = [0, 6, 0], sizes = [2, 16, 32], strides = [1, 1, 1]} : vector<2x22x32xf32> to vector<2x16x32xf32>
    %23 = tpu.concatenate %16, %17, %18, %19, %20, %21, %22 in 2 : vector<2x16x32xf32>, vector<2x16x32xf32>, vector<2x16x32xf32>, vector<2x16x32xf32>, vector<2x16x32xf32>, vector<2x16x32xf32>, vector<2x16x32xf32> -> vector<2x16x224xf32>
    %24 = vector.shape_cast %23 : vector<2x16x224xf32> to vector<32x224xf32>
    %c0_8 = arith.constant 0 : index
    %c0_9 = arith.constant 0 : index
    %25 = vector.load %arg4[%c0_8, %c0_9] : memref<224x32xf32, #tpu.memory_space<vmem>>, vector<224x32xf32>
    %cst_10 = arith.constant dense<0.000000e+00> : vector<32x32xf32>
    %26 = tpu.matmul %24, %25, %cst_10 {dimension_numbers = #tpu.dot_dimension_numbers<[1], [0], [0], [1], [0, 0, 1, 1], [], []>} : vector<32x224xf32>, vector<224x32xf32>, vector<32x32xf32> -> vector<32x32xf32>
    %c0_11 = arith.constant 0 : index
    %c0_12 = arith.constant 0 : index
    %27 = vector.load %arg5[%c0_11, %c0_12] : memref<1x32xf32, #tpu.memory_space<vmem>>, vector<1x32xf32>
    %28 = vector.broadcast %27 : vector<1x32xf32> to vector<32x32xf32>
    %29 = arith.addf %26, %28 : vector<32x32xf32>
    %30 = arith.addf %29, %7 : vector<32x32xf32>
    %cst_13 = arith.constant 0.000000e+00 : f32
    %31 = vector.broadcast %cst_13 : f32 to vector<32x32xf32>
    %32 = arith.cmpf oge, %30, %31 : vector<32x32xf32>
    %cst_14 = arith.constant 0.00999999977 : f32
    %33 = vector.broadcast %cst_14 : f32 to vector<32x32xf32>
    %34 = arith.mulf %33, %30 : vector<32x32xf32>
    %35 = arith.select %32, %30, %34 : vector<32x32xi1>, vector<32x32xf32>
    %c0_15 = arith.constant 0 : index
    %c0_16 = arith.constant 0 : index
    %36 = vector.load %arg6[%c0_15, %c0_16] : memref<32x32xf32, #tpu.memory_space<vmem>>, vector<32x32xf32>
    tpu.vector_store %arg6[%c0_15, %c0_16], %35 {strides = array<i32>} : memref<32x32xf32, #tpu.memory_space<vmem>>, vector<32x32xf32>,
    return
  }
  func.func @transform_0(%arg0: i32) -> (i32, i32) {
    %c0_i32 = arith.constant 0 : i32
    %c0_i32_0 = arith.constant 0 : i32
    return %arg0, %c0_i32 : i32, i32
  }
  func.func @transform_1(%arg0: i32) -> (i32, i32) {
    %c0_i32 = arith.constant 0 : i32
    %c0_i32_0 = arith.constant 0 : i32
    %c0_i32_1 = arith.constant 0 : i32
    return %c0_i32, %c0_i32_0 : i32, i32
  }
  func.func @transform_2(%arg0: i32) -> (i32, i32) {
    %c0_i32 = arith.constant 0 : i32
    %c0_i32_0 = arith.constant 0 : i32
    %c0_i32_1 = arith.constant 0 : i32
    return %c0_i32, %c0_i32_0 : i32, i32
  }
  func.func @transform_3(%arg0: i32) -> (i32, i32) {
    %c0_i32 = arith.constant 0 : i32
    %c0_i32_0 = arith.constant 0 : i32
    %c0_i32_1 = arith.constant 0 : i32
    return %c0_i32, %c0_i32_0 : i32, i32
  }
  func.func @transform_4(%arg0: i32) -> (i32, i32) {
    %c0_i32 = arith.constant 0 : i32
    %c0_i32_0 = arith.constant 0 : i32
    %c0_i32_1 = arith.constant 0 : i32
    return %c0_i32, %c0_i32_0 : i32, i32
  }
  func.func @transform_5(%arg0: i32) -> (i32, i32) {
    %c0_i32 = arith.constant 0 : i32
    %c0_i32_0 = arith.constant 0 : i32
    return %arg0, %c0_i32 : i32, i32
  }
}

</mosaic_0001>

<llo_original>
// kernel: tpu_custom_call.1
$region0: #{tpu_custom_call.1}
  #allocation0 [shape = 'u32[]', space=smem, size = 0x4, offset = 0x4, fixed_abs, tag = 'smem constant byte address 0x4 - core index']
  #allocation1 [shape = 'u32[144,128]{1,0:T(1,128)}', space=vmem, size = 0x12000, scoped, tag = 'internal scratch']
  %s0 = inlined_call_operand.vmem [shape: f32[32,28], index: 0, kind: input, shape index: {}]
  %s1 = inlined_call_operand.vmem [shape: f32[28,64], index: 1, kind: input, shape index: {}]
  %s2 = inlined_call_operand.vmem [shape: f32[1,64], index: 2, kind: input, shape index: {}]
  %s3 = inlined_call_operand.vmem [shape: f32[224,32], index: 3, kind: input, shape index: {}]
  %s4 = inlined_call_operand.vmem [shape: f32[1,32], index: 4, kind: input, shape index: {}]
  %s5 = inlined_call_operand.hbm [shape: f32[32,32], index: 5, kind: output, shape index: {}]
  %s6 = sld [smem:[#allocation0]]
  $region30: #{tpu_custom_call.1} parent=0
    _
  %s8 = ssub.s32 1, %s6
  %s9 = scalar_select 0, %s8, %s6
  $region1: #{tpu_custom_call.1} parent=0
    #allocation2 [shape = 'u8[16384]{0}', space=vmem, size = 0x4000, scoped, tag = 'output window, operand 0, single buffered']
    #allocation3 [shape = 's32[1]{0}', space=sflag, size = 0x4, scoped, tag = 'scoped memory for tpu_custom_call.1']
    %10 = vsyncpa [#allocation3], 0
    // Predicated region
    $region2: #{tpu_custom_call.1} parent=1 // pred_check
      _
    $region3: #{tpu_custom_call.1} parent=1 // pred_check_branch
      %12 = sbr.rel (0) target = $region5
    $region4: #{tpu_custom_call.1} parent=1 // pred_region
      _
    $region5: #{tpu_custom_call.1} parent=1 // pred_fallthru
      _
    // Predicated region
    $region6: #{tpu_custom_call.1} parent=1 // pred_check
      _
    $region7: #{tpu_custom_call.1} parent=1 // pred_check_branch
      %14 = sbr.rel (0) target = $region9
    $region8: #{tpu_custom_call.1} parent=1 // pred_region
      _
    $region9: #{tpu_custom_call.1} parent=1 // pred_fallthru
      _
    // Predicated region
    $region10: #{tpu_custom_call.1} parent=1 // pred_check
      _
    $region11: #{tpu_custom_call.1} parent=1 // pred_check_branch
      %16 = sbr.rel (0) target = $region13
    $region12: #{tpu_custom_call.1} parent=1 // pred_region
      _
    $region13: #{tpu_custom_call.1} parent=1 // pred_fallthru
      _
    // Predicated region
    $region14: #{tpu_custom_call.1} parent=1 // pred_check
      _
    $region15: #{tpu_custom_call.1} parent=1 // pred_check_branch
      %18 = sbr.rel (0) target = $region17
    $region16: #{tpu_custom_call.1} parent=1 // pred_region
      _
    $region17: #{tpu_custom_call.1} parent=1 // pred_fallthru
      _
    // Predicated region
    $region18: #{tpu_custom_call.1} parent=1 // pred_check
      _
    $region19: #{tpu_custom_call.1} parent=1 // pred_check_branch
      %20 = sbr.rel (0) target = $region21
    $region20: #{tpu_custom_call.1} parent=1 // pred_region
      _
    $region21: #{tpu_custom_call.1} parent=1 // pred_fallthru
      _
    %v21 = vld [vmem:[%s0] sm:$0xff]
    %v22 = vld [vmem:[%s0 + $0x8] sm:$0xff]
    %v23 = vld [vmem:[%s0 + $0x10] sm:$0xff]
    %v24 = vld [vmem:[%s0 + $0x18] sm:$0xff]
    %v25 = vld [vmem:[%s1] sm:$0xff]
    %v26 = vld [vmem:[%s1 + $0x8] sm:$0xff]
    %v27 = vld [vmem:[%s1 + $0x10] sm:$0xff]
    %v28 = vld [vmem:[%s1 + $0x18] sm:$0xf]
    %v29 = vld [vmem:[%s2] sm:$0x1]
    %v31 = vlaneseq
    %v32 = vshrl.u32 %v31, 7
    %v33 = vsub.s32 0, %v32
    %v34 = vrot.slane %v29, %v33
    %vm36 = vcmask 228352
    %v38 = vsel %vm36, %v21, 0
    %v41 = vsel %vm36, %v22, 0
    %v44 = vsel %vm36, %v23, 0
    %v47 = vsel %vm36, %v24, 0
    %vm49 = vcmask 1043456
    %v51 = vsel %vm49, %v28, 0
    %53 = vmatprep.subr.mxu0 0.0
    %54 = vmatpush1.msra.mxu0 0.0
    %55 = vmatprep.subr.mxu0 0.0
    %56 = vmatpush1.msra.mxu0 0.0
    %57 = vmatprep.subr.mxu0 0.0
    %58 = vmatpush1.msra.mxu0 0.0
    %59 = vmatprep.subr.mxu0 0.0
    %60 = vmatpush1.msra.mxu0 0.0
    %61 = vmatprep.subr.mxu0 0.0
    %62 = vmatpush1.msra.mxu0 0.0
    %63 = vmatprep.subr.mxu0 0.0
    %64 = vmatpush1.msra.mxu0 0.0
    %65 = vmatprep.subr.mxu0 0.0
    %66 = vmatpush1.msra.mxu0 0.0
    %67 = vmatprep.subr.mxu0 0.0
    %68 = vmatpush1.msra.mxu0 0.0
    %69 = vmatprep.subr.mxu0 0.0
    %70 = vmatpush1.msra.mxu0 0.0
    %71 = vmatprep.subr.mxu0 0.0
    %72 = vmatpush1.msra.mxu0 0.0
    %73 = vmatprep.subr.mxu0 0.0
    %74 = vmatpush1.msra.mxu0 0.0
    %75 = vmatprep.subr.mxu0 0.0
    %76 = vmatpush1.msra.mxu0 0.0
    %77 = vmatprep.subr.mxu0 0.0
    %78 = vmatpush1.msra.mxu0 %v51
    %79 = vmatprep.subr.mxu0 0.0
    %80 = vmatpush1.msra.mxu0 %v27
    %81 = vmatprep.subr.mxu0 0.0
    %82 = vmatpush1.msra.mxu0 %v26
    %83 = vmatprep.subr.mxu0 0.0
    %84 = vmatpush1.msra.mxu0 %v25
    %85 = vmatprep.subr.mxu0 0.0
    %86 = vmatpush2.msra.mxu0 0.0
    %87 = vmatprep.subr.mxu0 0.0
    %88 = vmatpush2.msra.mxu0 0.0
    %89 = vmatprep.subr.mxu0 0.0
    %90 = vmatpush2.msra.mxu0 0.0
    %91 = vmatprep.subr.mxu0 0.0
    %92 = vmatpush2.msra.mxu0 0.0
    %93 = vmatprep.subr.mxu0 0.0
    %94 = vmatpush2.msra.mxu0 0.0
    %95 = vmatprep.subr.mxu0 0.0
    %96 = vmatpush2.msra.mxu0 0.0
    %97 = vmatprep.subr.mxu0 0.0
    %98 = vmatpush2.msra.mxu0 0.0
    %99 = vmatprep.subr.mxu0 0.0
    %100 = vmatpush2.msra.mxu0 0.0
    %101 = vmatprep.subr.mxu0 0.0
    %102 = vmatpush2.msra.mxu0 0.0
    %103 = vmatprep.subr.mxu0 0.0
    %104 = vmatpush2.msra.mxu0 0.0
    %105 = vmatprep.subr.mxu0 0.0
    %106 = vmatpush2.msra.mxu0 0.0
    %107 = vmatprep.subr.mxu0 0.0
    %108 = vmatpush2.msra.mxu0 0.0
    %109 = vmatprep.subr.mxu0 0.0
    %110 = vmatpush2.msra.mxu0 0.0
    %111 = vmatprep.subr.mxu0 0.0
    %112 = vmatpush2.msra.mxu0 0.0
    %113 = vmatprep.subr.mxu0 0.0
    %114 = vmatpush2.msra.mxu0 0.0
    %115 = vmatprep.subr.mxu0 0.0
    %116 = vmatpush2.msra.mxu0 0.0
    %117 = vmatprep.mubr.f32.mxu0 0.0
    %118 = vmatmul.mubr.f32.gmra.mxu0 %v38
    %v119 = vpop.f32.mrf.mxu0
    %v120 = vadd.f32 %v34, %v119
    %v121 = vpop.f32.mrf.mxu0
    %122 = vmatprep.mubr.f32.mxu0 0.0
    %123 = vmatmul.mubr.f32.gmra.mxu0 %v41
    %v124 = vpop.f32.mrf.mxu0
    %v125 = vadd.f32 %v34, %v124
    %v126 = vpop.f32.mrf.mxu0
    %127 = vmatprep.mubr.f32.mxu0 0.0
    %128 = vmatmul.mubr.f32.gmra.mxu0 %v44
    %v129 = vpop.f32.mrf.mxu0
    %v130 = vadd.f32 %v34, %v129
    %v131 = vpop.f32.mrf.mxu0
    %132 = vmatprep.mubr.f32.mxu0 0.0
    %133 = vmatmul.mubr.f32.gmra.mxu0 %v47
    %v134 = vpop.f32.mrf.mxu0
    %v135 = vadd.f32 %v34, %v134
    %v136 = vpop.f32.mrf.mxu0
    %137 = vdwg.mxu0
    %vm138 = vcmp.ge.f32.partialorder %v120, 0.0
    %vm139 = vcmp.ge.f32.partialorder %v125, 0.0
    %vm140 = vcmp.ge.f32.partialorder %v130, 0.0
    %vm141 = vcmp.ge.f32.partialorder %v135, 0.0
    %v142 = vmul.f32 %v120, 0.01
    %v143 = vmul.f32 %v125, 0.01
    %v144 = vmul.f32 %v130, 0.01
    %v145 = vmul.f32 %v135, 0.01
    %v146 = vsel %vm138, %v120, %v142
    %v147 = vsel %vm139, %v125, %v143
    %v148 = vsel %vm140, %v130, %v144
    %v149 = vsel %vm141, %v135, %v145
    %vm154 = vcmask 1042432
    %v155 = vrot.slane %v146, 5
    %v156 = vrot.slane %v147, 5
    %v157 = vsel %vm154, %v155, %v156
    %v158 = vrot.slane %v148, 5
    %v159 = vrot.slane %v149, 5
    %v160 = vsel %vm154, %v158, %v159
    %v167 = vsel %vm154, 0.0, %v155
    %v168 = vsel %vm154, 0.0, %v158
    %v169 = vsel %vm154, %v156, 0.0
    %v170 = vsel %vm154, %v159, 0.0
    %vm175 = vcmask 1046528
    %v176 = vrot.slane %v167, 1
    %v177 = vrot.slane %v157, 1
    %v178 = vsel %vm175, %v176, %v177
    %v179 = vrot.slane %v169, 1
    %v180 = vsel %vm175, %v177, %v179
    %v181 = vrot.slane %v168, 1
    %v182 = vrot.slane %v160, 1
    %v183 = vsel %vm175, %v181, %v182
    %v184 = vrot.slane %v170, 1
    %v185 = vsel %vm175, %v182, %v184
    %186 = vrot.lane.b32.xlu0 %v178, 32
    %v187 = vpop.permute.xlu0 %186
    %188 = vrot.lane.b32.xlu0 %v180, 32
    %v189 = vpop.permute.xlu0 %188
    %190 = vrot.lane.b32.xlu0 %v183, 32
    %v191 = vpop.permute.xlu0 %190
    %192 = vrot.lane.b32.xlu0 %v185, 32
    %v193 = vpop.permute.xlu0 %192
    %vm198 = vcmask 1045504
    %v199 = vrot.slane %v167, 2
    %v200 = vrot.slane %v157, 2
    %v201 = vsel %vm198, %v199, %v200
    %v202 = vrot.slane %v169, 2
    %v203 = vsel %vm198, %v200, %v202
    %v204 = vrot.slane %v168, 2
    %v205 = vrot.slane %v160, 2
    %v206 = vsel %vm198, %v204, %v205
    %v207 = vrot.slane %v170, 2
    %v208 = vsel %vm198, %v205, %v207
    %209 = vrot.lane.b32.xlu0 %v201, 64
    %v210 = vpop.permute.xlu0 %209
    %211 = vrot.lane.b32.xlu0 %v203, 64
    %v212 = vpop.permute.xlu0 %211
    %213 = vrot.lane.b32.xlu0 %v206, 64
    %v214 = vpop.permute.xlu0 %213
    %215 = vrot.lane.b32.xlu0 %v208, 64
    %v216 = vpop.permute.xlu0 %215
    %vm221 = vcmask 1044480
    %v222 = vrot.slane %v167, 3
    %v223 = vrot.slane %v157, 3
    %v224 = vsel %vm221, %v222, %v223
    %v225 = vrot.slane %v169, 3
    %v226 = vsel %vm221, %v223, %v225
    %v227 = vrot.slane %v168, 3
    %v228 = vrot.slane %v160, 3
    %v229 = vsel %vm221, %v227, %v228
    %v230 = vrot.slane %v170, 3
    %v231 = vsel %vm221, %v228, %v230
    %232 = vrot.lane.b32.xlu0 %v224, 96
    %v233 = vpop.permute.xlu0 %232
    %234 = vrot.lane.b32.xlu0 %v226, 96
    %v235 = vpop.permute.xlu0 %234
    %236 = vrot.lane.b32.xlu0 %v229, 96
    %v237 = vpop.permute.xlu0 %236
    %238 = vrot.lane.b32.xlu0 %v231, 96
    %v239 = vpop.permute.xlu0 %238
    %v244 = vrot.slane %v167, 4
    %v245 = vrot.slane %v157, 4
    %v246 = vsel %vm49, %v244, %v245
    %v247 = vrot.slane %v169, 4
    %v248 = vsel %vm49, %v245, %v247
    %v249 = vrot.slane %v168, 4
    %v250 = vrot.slane %v160, 4
    %v251 = vsel %vm49, %v249, %v250
    %v252 = vrot.slane %v170, 4
    %v253 = vsel %vm49, %v250, %v252
    %v258 = vrot.slane %v167, 5
    %v259 = vrot.slane %v157, 5
    %v260 = vsel %vm154, %v258, %v259
    %v261 = vrot.slane %v169, 5
    %v262 = vsel %vm154, %v259, %v261
    %v263 = vrot.slane %v168, 5
    %v264 = vrot.slane %v160, 5
    %v265 = vsel %vm154, %v263, %v264
    %v266 = vrot.slane %v170, 5
    %v267 = vsel %vm154, %v264, %v266
    %268 = vrot.lane.b32.xlu0 %v260, 32
    %v269 = vpop.permute.xlu0 %268
    %270 = vrot.lane.b32.xlu0 %v262, 32
    %v271 = vpop.permute.xlu0 %270
    %272 = vrot.lane.b32.xlu0 %v265, 32
    %v273 = vpop.permute.xlu0 %272
    %274 = vrot.lane.b32.xlu0 %v267, 32
    %v275 = vpop.permute.xlu0 %274
    %vm280 = vcmask 1041408
    %v281 = vrot.slane %v167, 6
    %v282 = vrot.slane %v157, 6
    %v283 = vsel %vm280, %v281, %v282
    %v284 = vrot.slane %v169, 6
    %v285 = vsel %vm280, %v282, %v284
    %v286 = vrot.slane %v168, 6
    %v287 = vrot.slane %v160, 6
    %v288 = vsel %vm280, %v286, %v287
    %v289 = vrot.slane %v170, 6
    %v290 = vsel %vm280, %v287, %v289
    %291 = vrot.lane.b32.xlu0 %v283, 64
    %v292 = vpop.permute.xlu0 %291
    %293 = vrot.lane.b32.xlu0 %v285, 64
    %v294 = vpop.permute.xlu0 %293
    %295 = vrot.lane.b32.xlu0 %v288, 64
    %v296 = vpop.permute.xlu0 %295
    %297 = vrot.lane.b32.xlu0 %v290, 64
    %v298 = vpop.permute.xlu0 %297
    %vm303 = vcmask 261120
    %v304 = vsel %vm303, %v167, %v187
    %v305 = vsel %vm303, %v157, %v189
    %v306 = vsel %vm303, %v168, %v191
    %v307 = vsel %vm303, %v160, %v193
    %vm308 = vcmask 523264
    %v309 = vsel %vm308, %v304, %v210
    %v310 = vsel %vm308, %v305, %v212
    %v311 = vsel %vm308, %v306, %v214
    %v312 = vsel %vm308, %v307, %v216
    %vm313 = vcmask 785408
    %v314 = vsel %vm313, %v309, %v233
    %v315 = vsel %vm313, %v310, %v235
    %v316 = vsel %vm313, %v311, %v237
    %v317 = vsel %vm313, %v312, %v239
    %v318 = vsel %vm303, %v246, %v269
    %v319 = vsel %vm303, %v248, %v271
    %v320 = vsel %vm303, %v251, %v273
    %v321 = vsel %vm303, %v253, %v275
    %v322 = vsel %vm308, %v318, %v292
    %v323 = vsel %vm308, %v319, %v294
    %v324 = vsel %vm308, %v320, %v296
    %v325 = vsel %vm308, %v321, %v298
    %v326 = vld [vmem:[%s3] sm:$0xff]
    %v327 = vld [vmem:[%s3 + $0x8] sm:$0xff]
    %v328 = vld [vmem:[%s3 + $0x10] sm:$0xff]
    %v329 = vld [vmem:[%s3 + $0x18] sm:$0xff]
    %v330 = vld [vmem:[%s3 + $0x20] sm:$0xff]
    %v331 = vld [vmem:[%s3 + $0x28] sm:$0xff]
    %v332 = vld [vmem:[%s3 + $0x30] sm:$0xff]
    %v333 = vld [vmem:[%s3 + $0x38] sm:$0xff]
    %v334 = vld [vmem:[%s3 + $0x40] sm:$0xff]
    %v335 = vld [vmem:[%s3 + $0x48] sm:$0xff]
    %v336 = vld [vmem:[%s3 + $0x50] sm:$0xff]
    %v337 = vld [vmem:[%s3 + $0x58] sm:$0xff]
    %v338 = vld [vmem:[%s3 + $0x60] sm:$0xff]
    %v339 = vld [vmem:[%s3 + $0x68] sm:$0xff]
    %v340 = vld [vmem:[%s3 + $0x70] sm:$0xff]
    %v341 = vld [vmem:[%s3 + $0x78] sm:$0xff]
    %v342 = vld [vmem:[%s3 + $0x80] sm:$0xff]
    %v343 = vld [vmem:[%s3 + $0x88] sm:$0xff]
    %v344 = vld [vmem:[%s3 + $0x90] sm:$0xff]
    %v345 = vld [vmem:[%s3 + $0x98] sm:$0xff]
    %v346 = vld [vmem:[%s3 + $0xa0] sm:$0xff]
    %v347 = vld [vmem:[%s3 + $0xa8] sm:$0xff]
    %v348 = vld [vmem:[%s3 + $0xb0] sm:$0xff]
    %v349 = vld [vmem:[%s3 + $0xb8] sm:$0xff]
    %v350 = vld [vmem:[%s3 + $0xc0] sm:$0xff]
    %v351 = vld [vmem:[%s3 + $0xc8] sm:$0xff]
    %v352 = vld [vmem:[%s3 + $0xd0] sm:$0xff]
    %v353 = vld [vmem:[%s3 + $0xd8] sm:$0xff]
    %v354 = vld [vmem:[%s4] sm:$0x1]
    %v356 = vlaneseq
    %v357 = vshrl.u32 %v356, 7
    %v358 = vsub.s32 0, %v357
    %v359 = vrot.slane %v354, %v358
    %v362 = vsel %vm313, %v322, 0
    %v365 = vsel %vm313, %v323, 0
    %v368 = vsel %vm313, %v324, 0
    %v371 = vsel %vm313, %v325, 0
    %373 = vmatprep.subr.mxu0 0.0
    %374 = vmatpush1.msra.mxu0 %v341
    %375 = vmatprep.subr.mxu0 0.0
    %376 = vmatpush1.msra.mxu0 %v340
    %377 = vmatprep.subr.mxu0 0.0
    %378 = vmatpush1.msra.mxu0 %v339
    %379 = vmatprep.subr.mxu0 0.0
    %380 = vmatpush1.msra.mxu0 %v338
    %381 = vmatprep.subr.mxu0 0.0
    %382 = vmatpush1.msra.mxu0 %v337
    %383 = vmatprep.subr.mxu0 0.0
    %384 = vmatpush1.msra.mxu0 %v336
    %385 = vmatprep.subr.mxu0 0.0
    %386 = vmatpush1.msra.mxu0 %v335
    %387 = vmatprep.subr.mxu0 0.0
    %388 = vmatpush1.msra.mxu0 %v334
    %389 = vmatprep.subr.mxu0 0.0
    %390 = vmatpush1.msra.mxu0 %v333
    %391 = vmatprep.subr.mxu0 0.0
    %392 = vmatpush1.msra.mxu0 %v332
    %393 = vmatprep.subr.mxu0 0.0
    %394 = vmatpush1.msra.mxu0 %v331
    %395 = vmatprep.subr.mxu0 0.0
    %396 = vmatpush1.msra.mxu0 %v330
    %397 = vmatprep.subr.mxu0 0.0
    %398 = vmatpush1.msra.mxu0 %v329
    %399 = vmatprep.subr.mxu0 0.0
    %400 = vmatpush1.msra.mxu0 %v328
    %401 = vmatprep.subr.mxu0 0.0
    %402 = vmatpush1.msra.mxu0 %v327
    %403 = vmatprep.subr.mxu0 0.0
    %404 = vmatpush1.msra.mxu0 %v326
    %405 = vmatprep.subr.mxu0 0.0
    %406 = vmatpush2.msra.mxu0 0.0
    %407 = vmatprep.subr.mxu0 0.0
    %408 = vmatpush2.msra.mxu0 0.0
    %409 = vmatprep.subr.mxu0 0.0
    %410 = vmatpush2.msra.mxu0 0.0
    %411 = vmatprep.subr.mxu0 0.0
    %412 = vmatpush2.msra.mxu0 0.0
    %413 = vmatprep.subr.mxu0 0.0
    %414 = vmatpush2.msra.mxu0 %v353
    %415 = vmatprep.subr.mxu0 0.0
    %416 = vmatpush2.msra.mxu0 %v352
    %417 = vmatprep.subr.mxu0 0.0
    %418 = vmatpush2.msra.mxu0 %v351
    %419 = vmatprep.subr.mxu0 0.0
    %420 = vmatpush2.msra.mxu0 %v350
    %421 = vmatprep.subr.mxu0 0.0
    %422 = vmatpush2.msra.mxu0 %v349
    %423 = vmatprep.subr.mxu0 0.0
    %424 = vmatpush2.msra.mxu0 %v348
    %425 = vmatprep.subr.mxu0 0.0
    %426 = vmatpush2.msra.mxu0 %v347
    %427 = vmatprep.subr.mxu0 0.0
    %428 = vmatpush2.msra.mxu0 %v346
    %429 = vmatprep.subr.mxu0 0.0
    %430 = vmatpush2.msra.mxu0 %v345
    %431 = vmatprep.subr.mxu0 0.0
    %432 = vmatpush2.msra.mxu0 %v344
    %433 = vmatprep.subr.mxu0 0.0
    %434 = vmatpush2.msra.mxu0 %v343
    %435 = vmatprep.subr.mxu0 0.0
    %436 = vmatpush2.msra.mxu0 %v342
    %437 = vmatprep.mubr.f32.mxu0 %v362
    %438 = vmatmul.mubr.f32.gmra.mxu0 %v314
    %v439 = vpop.f32.mrf.mxu0
    %v440 = vadd.f32 %v359, %v439
    %v441 = vpop.f32.mrf.mxu0
    %442 = vmatprep.mubr.f32.mxu0 %v365
    %443 = vmatmul.mubr.f32.gmra.mxu0 %v315
    %v444 = vpop.f32.mrf.mxu0
    %v445 = vadd.f32 %v359, %v444
    %v446 = vpop.f32.mrf.mxu0
    %447 = vmatprep.mubr.f32.mxu0 %v368
    %448 = vmatmul.mubr.f32.gmra.mxu0 %v316
    %v449 = vpop.f32.mrf.mxu0
    %v450 = vadd.f32 %v359, %v449
    %v451 = vpop.f32.mrf.mxu0
    %452 = vmatprep.mubr.f32.mxu0 %v371
    %453 = vmatmul.mubr.f32.gmra.mxu0 %v317
    %v454 = vpop.f32.mrf.mxu0
    %v455 = vadd.f32 %v359, %v454
    %v456 = vpop.f32.mrf.mxu0
    %457 = vdwg.mxu0
    %462 = vrot.lane.b32.xlu0 %v120, 96
    %v463 = vpop.permute.xlu0 %462
    %464 = vrot.lane.b32.xlu0 %v125, 96
    %v465 = vpop.permute.xlu0 %464
    %466 = vrot.lane.b32.xlu0 %v130, 96
    %v467 = vpop.permute.xlu0 %466
    %468 = vrot.lane.b32.xlu0 %v135, 96
    %v469 = vpop.permute.xlu0 %468
    %v474 = vadd.f32 %v440, %v463
    %v475 = vadd.f32 %v445, %v465
    %v476 = vadd.f32 %v450, %v467
    %v477 = vadd.f32 %v455, %v469
    %vm478 = vcmp.ge.f32.partialorder %v474, 0.0
    %vm479 = vcmp.ge.f32.partialorder %v475, 0.0
    %vm480 = vcmp.ge.f32.partialorder %v476, 0.0
    %vm481 = vcmp.ge.f32.partialorder %v477, 0.0
    %v482 = vmul.f32 %v474, 0.01
    %v483 = vmul.f32 %v475, 0.01
    %v484 = vmul.f32 %v476, 0.01
    %v485 = vmul.f32 %v477, 0.01
    %v486 = vsel %vm478, %v474, %v482
    %v487 = vsel %vm479, %v475, %v483
    %v488 = vsel %vm480, %v476, %v484
    %v489 = vsel %vm481, %v477, %v485
    %490 = vst.msk [vmem:[#allocation2] sm:$0xff] %vm303, %v486
    %491 = vst.msk [vmem:[#allocation2 + $0x8] sm:$0xff] %vm303, %v487
    %492 = vst.msk [vmem:[#allocation2 + $0x10] sm:$0xff] %vm303, %v488
    %493 = vst.msk [vmem:[#allocation2 + $0x18] sm:$0xff] %vm303, %v489
    // Predicated region
    $region22: #{tpu_custom_call.1} parent=1 // pred_check
      _
    $region23: #{tpu_custom_call.1} parent=1 // pred_check_branch
      %495 = sbr.rel (0) target = $region25
    $region24: #{tpu_custom_call.1} parent=1 // pred_region
      %s497 = ssub.s32 512, 512
      %498 = vsyncadd [#allocation3], %s497
      %s499 = sshll.u32 [#allocation2], 4
      %s500 = int_to_ptr.vmem [resolvable:$true] %s499
      %505 = dma.vmem_to_hbm [thread:$0]  %s500, 512, %s5, [#allocation3], 128, 128, 8
    $region25: #{tpu_custom_call.1} parent=1 // pred_fallthru
      _
    // Predicated region
    $region26: #{tpu_custom_call.1} parent=1 // pred_check
      _
    $region27: #{tpu_custom_call.1} parent=1 // pred_check_branch
      %507 = sbr.rel (0) target = $region29
    $region28: #{tpu_custom_call.1} parent=1 // pred_region
      %508 = dma.done [#allocation3], 512
    $region29: #{tpu_custom_call.1} parent=1 // pred_fallthru
      _
    %509 = vsyncpa [#allocation3], 1

</llo_original>
